<compile_context>
chip_gen: v7x
topology: tpu7x:2x2x1
jax: 0.10.0
libtpu: 0.0.40
codegen_flags: <defaults>
</compile_context>

<pallas_src>
import functools

import numpy as np

import jax
import jax.numpy as jnp
from jax.experimental import pallas as pl
from jax.experimental.pallas import tpu as pltpu


def _round_up(x, m):
    return ((x + m - 1) // m) * m


# ----------------------------------------------------------------------------- kernel ---
def _proj_matmul_kernel(kcnt_ref, ktile_ref, lhs_ref, m_ref, o_ref, *, lhs_resident):
    """Grid step = (output model o, P_out tile n, active-K step k).

    kcnt_ref : SMEM (OL, nN)        number of nonzero K tiles for (o, n)
    ktile_ref: SMEM (OL, nN, maxK)  K-tile id visited at step k (padded with last id)
    lhs_ref  : VMEM (nK, R, tk)     resident stacked inputs  OR  (1, R, tk) current tile
    m_ref    : VMEM (1, tk, tn)     bilinear sampling-matrix tile for (o, k-tile, n)
    o_ref    : VMEM (1, R, tn) f32  output tile; doubles as the accumulator (its block
                                    index is constant across the k axis -> stays resident)
    """
    o_g = pl.program_id(0)
    n = pl.program_id(1)
    k = pl.program_id(2)

    @pl.when(k == 0)
    def _():
        o_ref[...] = jnp.zeros_like(o_ref)

    # Only active (nonzero) K tiles contribute; padded steps re-use the previous tile's
    # block index (no extra DMA) and are skipped here.
    @pl.when(k < kcnt_ref[o_g, n])
    def _():
        if lhs_resident:
            lhs = lhs_ref[ktile_ref[o_g, n, k]]
        else:
            lhs = lhs_ref[0]
        o_ref[0] += jnp.dot(lhs, m_ref[0], preferred_element_type=jnp.float32)


def _pallas_proj_matmul(lhs3, m_cat, kcount, ktile, *, tn, tk, max_k, lhs_resident):
    """out[o] = concat_k(lhs3) @ m_cat[o], walking only the nonzero K tiles per (o, n).

    lhs3  : (nK, R, tk)              stacked input images, K-tile major
    m_cat : (OL, K_pad, N_pad)       padded bilinear sampling matrices (compute dtype)
    returns (OL, R, N_pad) float32
    """
    nk, r, _ = lhs3.shape
    ol, _, n_pad = m_cat.shape
    nn = n_pad // tn
    itemsize = jnp.dtype(m_cat.dtype).itemsize

    if lhs_resident:
        lhs_spec = pl.BlockSpec((nk, r, tk), lambda o, n, k, cnt, kt: (0, 0, 0))
    else:
        lhs_spec = pl.BlockSpec((1, r, tk), lambda o, n, k, cnt, kt: (kt[o, n, k], 0, 0))
    m_spec = pl.BlockSpec((1, tk, tn), lambda o, n, k, cnt, kt: (o, kt[o, n, k], n))
    out_spec = pl.BlockSpec((1, r, tn), lambda o, n, k, cnt, kt: (o, 0, n))

    # VMEM budget from the actual tile footprint (double-buffered), capped well below the
    # v7x 64 MiB physical VMEM so the compiler keeps headroom for its own scratch.
    lhs_buf = 2 * (nk if lhs_resident else 1) * r * tk * itemsize
    footprint = 2 * tk * tn * itemsize + 2 * r * tn * 4 + lhs_buf
    vmem_limit = int(min(48 * 1024 * 1024, max(16 * 1024 * 1024, 2 * footprint)))

    return pl.pallas_call(
        functools.partial(_proj_matmul_kernel, lhs_resident=lhs_resident),
        out_shape=jax.ShapeDtypeStruct((ol, r, n_pad), jnp.float32),
        grid_spec=pltpu.PrefetchScalarGridSpec(
            num_scalar_prefetch=2,
            grid=(ol, nn, max_k),
            in_specs=[lhs_spec, m_spec],
            out_specs=out_spec,
        ),
        compiler_params=pltpu.CompilerParams(
            dimension_semantics=("parallel", "parallel", "arbitrary"),
            vmem_limit_bytes=vmem_limit,
        ),
    )(kcount, ktile, lhs3, m_cat)


# --------------------------------------------------- init-time sampling-matrix building --
def _bilinear_sampling_matrix(gx, gy, in_h, in_w, dtype):
    """Dense matrix M (P_in, P_out): grid_sample(img, grid) == img_flat @ M.

    align_corners=True, padding_mode='zeros'; the sentinel coordinate 2.0 (and any
    out-of-range corner) gets zero weight.  Built once at __init__ time in plain JAX.
    """
    p_in = in_h * in_w
    ix = (gx + 1.0) * 0.5 * (in_w - 1)
    iy = (gy + 1.0) * 0.5 * (in_h - 1)
    x0 = jnp.floor(ix)
    y0 = jnp.floor(iy)
    x1 = x0 + 1.0
    y1 = y0 + 1.0
    wx1 = ix - x0
    wx0 = 1.0 - wx1
    wy1 = iy - y0
    wy0 = 1.0 - wy1
    rows = jnp.arange(p_in, dtype=jnp.int32)[:, None]                    # (P_in, 1)

    def corner(xc, yc, w):
        valid = (xc >= 0.0) & (xc <= in_w - 1.0) & (yc >= 0.0) & (yc <= in_h - 1.0)
        fidx = (yc.astype(jnp.int32) * in_w + xc.astype(jnp.int32))[None, :]
        wv = jnp.where(valid, w, 0.0)[None, :]                           # (1, P_out)
        return jnp.where(rows == fidx, wv, 0.0)                          # (P_in, P_out)

    m = corner(x0, y0, wx0 * wy0)
    m = m + corner(x1, y0, wx1 * wy0)
    m = m + corner(x0, y1, wx0 * wy1)
    m = m + corner(x1, y1, wx1 * wy1)
    return m.astype(dtype)


def _build_m_cat(grids, in_hw, dtype):
    """Precompute M[o] = concat_i M_pair(o, i), shape (OL, input_len*P_in, P_out).

    The (i_g, o_g) permutation reproduces PyTorch's exact flat-index pairing of images and
    grids inside grid_sample (multi_out_batch is ordered (set, o, i) while _grids_cache is
    ordered (set, i, o)); the pairing is independent of the set index, so one M per output
    model covers every set in the batch.
    """
    il, ol, oh, ow, _ = grids.shape
    in_h, in_w = in_hw
    p_out = oh * ow
    per_o = []
    for o in range(ol):
        per_i = []
        for i_pos in range(il):
            q = o * il + i_pos
            o_g = q % ol
            i_g = (q // ol) % il
            g = grids[i_g, o_g].reshape(p_out, 2)
            per_i.append(_bilinear_sampling_matrix(g[:, 0], g[:, 1], in_h, in_w, dtype))
        per_o.append(jnp.concatenate(per_i, axis=0))                     # (IL*P_in, P_out)
    return jnp.stack(per_o, axis=0)                                      # (OL, IL*P_in, P_out)


def _build_block_sparsity(m_np, tk, tn):
    """Per (o, n-tile): list of K-tile indices with any nonzero entry (+ count).

    Padded slots repeat the last active index so the kernel's m_cat block index does not
    change on skipped steps (no extra DMA).
    """
    ol, k_pad, n_pad = m_np.shape
    nk, nn = k_pad // tk, n_pad // tn
    nz = (np.abs(m_np.reshape(ol, nk, tk, nn, tn)) > 0).any(axis=(2, 4))  # (ol, nk, nn)
    counts = nz.sum(axis=1)                                               # (ol, nn)
    max_k = max(1, int(counts.max()))
    ktile = np.zeros((ol, nn, max_k), np.int32)
    kcount = np.zeros((ol, nn), np.int32)
    for o in range(ol):
        for n in range(nn):
            idxs = np.nonzero(nz[o, :, n])[0]
            cnt = len(idxs)
            kcount[o, n] = cnt
            if cnt:
                ktile[o, n, :cnt] = idxs
                ktile[o, n, cnt:] = idxs[-1]
    return jnp.asarray(kcount), jnp.asarray(ktile), max_k


# -------------------------------------------------------------------------- module glue --
class ProjectionConverterPallas:
    """JAX/Pallas port of ProjectionConverter.forward (is_depth handled as glue)."""

    def __init__(self, grids, input_len, output_len, in_hw, out_hw,
                 input_zfactor=None, output_zfactor=None,
                 compute_dtype=jnp.bfloat16, tile_n=1024, tile_k=2048,
                 lhs_resident_budget_bytes=8 * 1024 * 1024):
        # grids: (input_len, output_len, out_h, out_w, 2) -- same as self.grids in torch.
        self.input_len = input_len
        self.output_len = output_len
        self.in_hw = tuple(in_hw)
        self.out_hw = tuple(out_hw)
        self.input_zfactor = input_zfactor      # None when all depth_from == OPTI_CENTER
        self.output_zfactor = output_zfactor
        # bf16 storage of M halves the dominant HBM traffic; accumulation stays f32.
        self.compute_dtype = compute_dtype
        self.lhs_resident_budget_bytes = lhs_resident_budget_bytes

        in_h, in_w = self.in_hw
        out_h, out_w = self.out_hw
        p_in = in_h * in_w
        self.p_out = out_h * out_w
        self.k_total = input_len * p_in

        # ---- tile selection (fixed at init; M is padded once, not per forward) ----
        n128 = _round_up(self.p_out, 128)
        k128 = _round_up(self.k_total, 128)
        tn = min(tile_n, n128)
        tk = min(tile_k, k128)
        if output_len == 1 and n128 >= 256:
            # v7x megacore: keep >= 2 tiles on a parallel axis when OL == 1.
            tn = min(tn, max(128, (n128 // 2) // 128 * 128))
        self.tn, self.tk = tn, tk
        self.n_pad = _round_up(self.p_out, tn)
        self.k_pad = _round_up(self.k_total, tk)
        self.nk = self.k_pad // tk

        # All grid-dependent work (sampling matrices, padding, sparsity tables) at init.
        m_cat = _build_m_cat(jnp.asarray(grids, jnp.float32), self.in_hw, jnp.float32)
        m_cat = jnp.pad(m_cat, ((0, 0),
                                (0, self.k_pad - self.k_total),
                                (0, self.n_pad - self.p_out)))
        self.kcount, self.ktile, self.max_k = _build_block_sparsity(
            np.asarray(m_cat), tk, tn)
        self.m_cat = m_cat.astype(compute_dtype)

    def to_converted_tensor(self, batch):
        b, c, in_h, in_w = batch.shape
        if b == 0 or b % self.input_len != 0:
            raise ValueError(f"Batch size should be {self.input_len}x")
        num_set = b // self.input_len
        p_in = in_h * in_w
        out_h, out_w = self.out_hw
        r = num_set * c
        itemsize = jnp.dtype(self.compute_dtype).itemsize
        r_pad = _round_up(r, 8 * (4 // itemsize))         # 8 rows (f32) / 16 rows (bf16)

        # rows = (set, channel), K = (input index, pixel); pad rows/K (cheap, lhs is tiny).
        lhs = batch.reshape(num_set, self.input_len, c, p_in)
        lhs = lhs.transpose(0, 2, 1, 3).reshape(r, self.input_len * p_in)
        lhs = jnp.pad(lhs, ((0, r_pad - r), (0, self.k_pad - self.k_total)))
        lhs = lhs.astype(self.compute_dtype)
        # K-tile-major layout so the kernel picks K tiles by dynamic first-axis index.
        lhs3 = lhs.reshape(r_pad, self.nk, self.tk).transpose(1, 0, 2)

        lhs_resident = (2 * self.nk * r_pad * self.tk * itemsize
                        <= self.lhs_resident_budget_bytes)
        out = _pallas_proj_matmul(lhs3, self.m_cat, self.kcount, self.ktile,
                                  tn=self.tn, tk=self.tk, max_k=self.max_k,
                                  lhs_resident=lhs_resident)
        out = out[:, :r, :self.p_out]
        # (OL, num_set*C, P_out) -> (num_set*OL, C, out_h, out_w), group = set*OL + o.
        out = out.reshape(self.output_len, num_set, c, out_h, out_w)
        out = out.transpose(1, 0, 2, 3, 4)
        return out.reshape(num_set * self.output_len, c, out_h, out_w)

    def forward(self, batch, is_depth=False):
        # TODO(synk): z-factor path (depth_from == Z_VAL) stays plain-JAX elementwise glue;
        # all-OPTI_CENTER models give zfactor=None, so is_depth=False is the full hot path.
        if is_depth and self.input_zfactor is not None:
            nset = batch.shape[0] // self.input_len
            batch = batch * jnp.tile(self.input_zfactor, (nset, 1, 1, 1))
        out = self.to_converted_tensor(batch)
        if is_depth and self.output_zfactor is not None:
            nset_o = out.shape[0] // self.output_len
            out = out * jnp.tile(self.output_zfactor, (nset_o, 1, 1, 1))
        return out


# --------------------------------------------------------------------------- reference ---
def _reference_grid_sample(images, grids):
    """Pure-JAX bilinear grid_sample, align_corners=True, padding_mode='zeros'."""
    n, c, h, w = images.shape
    gx = grids[..., 0]
    gy = grids[..., 1]
    ix = (gx + 1.0) * 0.5 * (w - 1)
    iy = (gy + 1.0) * 0.5 * (h - 1)
    x0 = jnp.floor(ix)
    y0 = jnp.floor(iy)
    x1 = x0 + 1.0
    y1 = y0 + 1.0
    wx1 = ix - x0
    wx0 = 1.0 - wx1
    wy1 = iy - y0
    wy0 = 1.0 - wy1

    def gather(xc, yc, wgt):
        valid = ((xc >= 0) & (xc <= w - 1) & (yc >= 0) & (yc <= h - 1)).astype(images.dtype)
        xi = jnp.clip(xc, 0, w - 1).astype(jnp.int32)
        yi = jnp.clip(yc, 0, h - 1).astype(jnp.int32)
        vals = jax.vmap(lambda im, yy, xx: im[:, yy, xx])(images, yi, xi)  # (n, c, oh, ow)
        return vals * (valid * wgt)[:, None, :, :]

    return (gather(x0, y0, wx0 * wy0) + gather(x1, y0, wx1 * wy0)
            + gather(x0, y1, wx0 * wy1) + gather(x1, y1, wx1 * wy1))


def _reference_forward(batch, grids, input_len, output_len, out_hw):
    """Faithful replica of ProjectionConverter.to_converted_tensor/_convert."""
    b, c, in_h, in_w = batch.shape
    out_h, out_w = out_hw
    num_set = b // input_len
    mob = jnp.tile(batch.reshape(num_set, input_len, c, in_h, in_w),
                   (1, output_len, 1, 1, 1)).reshape(output_len * b, c, in_h, in_w)
    gcache = jnp.tile(grids, (num_set, 1, 1, 1, 1)).reshape(b * output_len, out_h, out_w, 2)
    sampled = _reference_grid_sample(mob, gcache)
    bs = sampled.shape[0]
    return sampled.reshape(bs // input_len, input_len, c, out_h, out_w).sum(axis=1)


# -------------------------------------------------------------------------------- main ---
def _make_case(key, input_len, output_len, in_hw, out_hw, channels, num_set):
    k_grid, k_mask, k_img = jax.random.split(key, 3)
    out_h, out_w = out_hw
    # Synthetic sampling grids with the same shape/semantics as ProjectionConverter.grids:
    # values in [-1, 1]; ~10% of pixels marked "not assigned" with the sentinel value 2.0.
    grids = jax.random.uniform(
        k_grid, (input_len, output_len, out_h, out_w, 2),
        minval=-1.0, maxval=1.0, dtype=jnp.float32)
    invalid = jax.random.uniform(k_mask, (input_len, output_len, out_h, out_w, 1)) < 0.1
    grids = jnp.where(invalid, jnp.float32(2.0), grids)
    batch = jax.random.uniform(
        k_img, (num_set * input_len, channels, in_hw[0], in_hw[1]), dtype=jnp.float32)
    return grids, batch


def _run_case(key, input_len, output_len, in_hw, out_hw, channels, num_set,
              tile_n, tile_k, compute_dtype, atol, lhs_resident_budget):
    grids, batch = _make_case(key, input_len, output_len, in_hw, out_hw, channels, num_set)
    conv = ProjectionConverterPallas(
        grids, input_len, output_len, in_hw, out_hw,
        compute_dtype=compute_dtype, tile_n=tile_n, tile_k=tile_k,
        lhs_resident_budget_bytes=lhs_resident_budget)
    out = jax.block_until_ready(conv.forward(batch))
    ref = _reference_forward(batch, grids, input_len, output_len, out_hw)
    expect_shape = (num_set * output_len, channels, out_hw[0], out_hw[1])
    assert out.shape == expect_shape, (out.shape, expect_shape)
    err = float(jnp.max(jnp.abs(out - ref)))
    assert err <= atol, err
    return err


if __name__ == "__main__":
    key = jax.random.PRNGKey(0)
    k1, k2 = jax.random.split(key)

    # Case 1: 2 input cameras -> 1 output projection, f32, tiled-LHS fallback path forced
    # (budget=0); exercises the data-dependent LHS index_map and 2 N tiles (OL==1 rule).
    _run_case(k1, input_len=2, output_len=1, in_hw=(16, 16), out_hw=(16, 16),
              channels=3, num_set=2, tile_n=1024, tile_k=2048,
              compute_dtype=jnp.float32, atol=1e-4, lhs_resident_budget=0)

    # Case 2: 2 inputs -> 2 outputs, default bf16 weights, small tiles so the multi-step
    # sparse K walk and the resident-LHS dynamic K-tile pick are exercised.
    # Tolerance loosened for bf16 storage of the bilinear weights (accumulation is f32).
    _run_case(k2, input_len=2, output_len=2, in_hw=(16, 16), out_hw=(16, 16),
              channels=3, num_set=2, tile_n=128, tile_k=128,
              compute_dtype=jnp.bfloat16, atol=5e-2,
              lhs_resident_budget=8 * 1024 * 1024)

    print("KERNEL_OK")
</pallas_src>

<mosaic_0001>
module attributes {stable_mosaic.version = 11 : i64} {
  func.func @_proj_matmul_kernel(%arg0: i32, %arg1: i32, %arg2: i32, %arg3: memref<1x2xi32, #tpu.memory_space<smem>>, %arg4: memref<1x2x1xi32, #tpu.memory_space<smem>>, %arg5: memref<1x8x512xf32, #tpu.memory_space<vmem>>, %arg6: memref<1x512x128xf32, #tpu.memory_space<vmem>>, %arg7: memref<1x8x128xf32, #tpu.memory_space<vmem>>) attributes {dimension_semantics = [#tpu.dimension_semantics<parallel>, #tpu.dimension_semantics<parallel>, #tpu.dimension_semantics<arbitrary>], iteration_bounds = array<i64: 1, 2, 1>, scalar_prefetch = 2 : i64, scratch_operands = 0 : i64, tpu.core_type = #tpu.core_type<tc>, window_params = [{transform_indices = @transform_0, window_bounds = array<i64: 1, 8, 512>}, {transform_indices = @transform_1, window_bounds = array<i64: 1, 512, 128>}, {transform_indices = @transform_2, window_bounds = array<i64: 1, 8, 128>}]} {
    %c0_i32 = arith.constant 0 : i32
    %0 = arith.cmpi eq, %arg2, %c0_i32 : i32
    %1 = arith.extui %0 : i1 to i32
    %c0_i32_0 = arith.constant 0 : i32
    %2 = arith.cmpi ne, %1, %c0_i32_0 : i32
    scf.if %2 {
      %cst = arith.constant 0.000000e+00 : f32
      %9 = vector.broadcast %cst : f32 to vector<1x8x128xf32>
      %c0 = arith.constant 0 : index
      %c0_2 = arith.constant 0 : index
      %c0_3 = arith.constant 0 : index
      %10 = vector.load %arg7[%c0, %c0_2, %c0_3] : memref<1x8x128xf32, #tpu.memory_space<vmem>>, vector<1x8x128xf32>
      tpu.vector_store %arg7[%c0, %c0_2, %c0_3], %9 {strides = array<i32>} : memref<1x8x128xf32, #tpu.memory_space<vmem>>, vector<1x8x128xf32>,
    } else {
    }
    %3 = arith.index_cast %arg0 : i32 to index
    %4 = arith.index_cast %arg1 : i32 to index
    %5 = memref.load %arg3[%3, %4] : memref<1x2xi32, #tpu.memory_space<smem>>
    %6 = arith.cmpi slt, %arg2, %5 : i32
    %7 = arith.extui %6 : i1 to i32
    %c0_i32_1 = arith.constant 0 : i32
    %8 = arith.cmpi ne, %7, %c0_i32_1 : i32
    scf.if %8 {
      %c0 = arith.constant 0 : index
      %c0_2 = arith.constant 0 : index
      %c0_3 = arith.constant 0 : index
      %9 = vector.load %arg5[%c0, %c0_2, %c0_3] : memref<1x8x512xf32, #tpu.memory_space<vmem>>, vector<1x8x512xf32>
      %10 = vector.shape_cast %9 : vector<1x8x512xf32> to vector<8x512xf32>
      %c0_4 = arith.constant 0 : index
      %c0_5 = arith.constant 0 : index
      %c0_6 = arith.constant 0 : index
      %11 = vector.load %arg7[%c0_4, %c0_5, %c0_6] : memref<1x8x128xf32, #tpu.memory_space<vmem>>, vector<1x8x128xf32>
      %12 = vector.shape_cast %11 : vector<1x8x128xf32> to vector<8x128xf32>
      %c0_7 = arith.constant 0 : index
      %c0_8 = arith.constant 0 : index
      %c0_9 = arith.constant 0 : index
      %13 = vector.load %arg6[%c0_7, %c0_8, %c0_9] : memref<1x512x128xf32, #tpu.memory_space<vmem>>, vector<1x512x128xf32>
      %14 = vector.shape_cast %13 : vector<1x512x128xf32> to vector<512x128xf32>
      %cst = arith.constant dense<0.000000e+00> : vector<8x128xf32>
      %15 = tpu.matmul %10, %14, %cst {dimension_numbers = #tpu.dot_dimension_numbers<[1], [0], [0], [1], [0, 0, 1, 1], [], []>} : vector<8x512xf32>, vector<512x128xf32>, vector<8x128xf32> -> vector<8x128xf32>
      %16 = arith.addf %12, %15 : vector<8x128xf32>
      %c0_10 = arith.constant 0 : index
      %c0_11 = arith.constant 0 : index
      %c0_12 = arith.constant 0 : index
      %17 = vector.load %arg7[%c0_10, %c0_11, %c0_12] : memref<1x8x128xf32, #tpu.memory_space<vmem>>, vector<1x8x128xf32>
      %18 = vector.shape_cast %17 : vector<1x8x128xf32> to vector<8x128xf32>
      %19 = vector.shape_cast %16 : vector<8x128xf32> to vector<1x8x128xf32>
      tpu.vector_store %arg7[%c0_10, %c0_11, %c0_12], %19 {strides = array<i32>} : memref<1x8x128xf32, #tpu.memory_space<vmem>>, vector<1x8x128xf32>,
    } else {
    }
    return
  }
  func.func @transform_0(%arg0: i32, %arg1: i32, %arg2: i32, %arg3: memref<1x2xi32, #tpu.memory_space<smem>>, %arg4: memref<1x2x1xi32, #tpu.memory_space<smem>>) -> (i32, i32, i32) {
    %0 = arith.index_cast %arg0 : i32 to index
    %1 = arith.index_cast %arg1 : i32 to index
    %2 = arith.index_cast %arg2 : i32 to index
    %3 = memref.load %arg4[%0, %1, %2] : memref<1x2x1xi32, #tpu.memory_space<smem>>
    %c0_i32 = arith.constant 0 : i32
    %c0_i32_0 = arith.constant 0 : i32
    %c0_i32_1 = arith.constant 0 : i32
    return %3, %c0_i32, %c0_i32_0 : i32, i32, i32
  }
  func.func @transform_1(%arg0: i32, %arg1: i32, %arg2: i32, %arg3: memref<1x2xi32, #tpu.memory_space<smem>>, %arg4: memref<1x2x1xi32, #tpu.memory_space<smem>>) -> (i32, i32, i32) {
    %0 = arith.index_cast %arg0 : i32 to index
    %1 = arith.index_cast %arg1 : i32 to index
    %2 = arith.index_cast %arg2 : i32 to index
    %3 = memref.load %arg4[%0, %1, %2] : memref<1x2x1xi32, #tpu.memory_space<smem>>
    %c0_i32 = arith.constant 0 : i32
    return %arg0, %3, %arg1 : i32, i32, i32
  }
  func.func @transform_2(%arg0: i32, %arg1: i32, %arg2: i32, %arg3: memref<1x2xi32, #tpu.memory_space<smem>>, %arg4: memref<1x2x1xi32, #tpu.memory_space<smem>>) -> (i32, i32, i32) {
    %c0_i32 = arith.constant 0 : i32
    %c0_i32_0 = arith.constant 0 : i32
    return %arg0, %c0_i32, %arg1 : i32, i32, i32
  }
}

</mosaic_0001>

<llo_original>
// kernel: tpu_custom_call.1
$region0: #{tpu_custom_call.1}
  #allocation0 [shape = 'u32[]', space=smem, size = 0x4, offset = 0x4, fixed_abs, tag = 'smem constant byte address 0x4 - core index']
  #allocation1 [shape = 'u32[144,128]{1,0:T(1,128)}', space=vmem, size = 0x12000, scoped, tag = 'internal scratch']
  #allocation2 [shape = 's32[1]{0}', space=sflag, size = 0x4, scoped, tag = 'scoped memory for tpu_custom_call.1']
  #allocation3 [shape = 'u8[512]{0}', space=smem, size = 0x200, scoped, tag = 'prefetched SMEM operand 0']
  #allocation4 [shape = 'u8[1024]{0}', space=smem, size = 0x400, scoped, tag = 'prefetched SMEM operand 1']
  %s0 = inlined_call_operand.vmem [shape: s32[1,2], index: 0, kind: input, shape index: {}]
  %s1 = inlined_call_operand.vmem [shape: s32[1,2,1], index: 1, kind: input, shape index: {}]
  %s2 = inlined_call_operand.hbm [shape: f32[1,8,512], index: 2, kind: input, shape index: {}]
  %s3 = inlined_call_operand.hbm [shape: f32[1,512,256], index: 3, kind: input, shape index: {}]
  %s4 = inlined_call_operand.hbm [shape: f32[1,8,256], index: 4, kind: output, shape index: {}]
  %s5 = sld [smem:[#allocation0]]
  $region57: #{tpu_custom_call.1} parent=0
    _
  %s7 = ssub.s32 1, %s5
  %s8 = scalar_select 0, %s7, %s5
  %s9 = sshll.u32 %s0, 4
  %s10 = int_to_ptr.vmem [resolvable:$true] %s9
  %12 = dma.vmem_to_smem %s10, 16, [#allocation3], [#allocation2]
  %s13 = sshll.u32 %s1, 4
  %s14 = int_to_ptr.vmem [resolvable:$true] %s13
  %16 = dma.vmem_to_smem %s14, 32, [#allocation4], [#allocation2]
  %17 = dma.done [#allocation2], 48
  %18 = sfence
  $region1: #{tpu_custom_call.1} parent=0
    #allocation5 [shape = 'u8[32768]{0}', space=vmem, size = 0x8000, scoped, tag = 'input window, operand 2']
    #allocation6 [shape = 's32[2]{0}', space=sflag, size = 0x8, scoped, tag = 'scoped memory for tpu_custom_call.1']
    #allocation7 [shape = 's32[2]{0}', space=sflag, size = 0x8, scoped, tag = 'scoped memory for tpu_custom_call.1']
    #allocation8 [shape = 'u8[524288]{0}', space=vmem, size = 0x80000, scoped, tag = 'input window, operand 3']
    #allocation9 [shape = 's32[2]{0}', space=sflag, size = 0x8, scoped, tag = 'scoped memory for tpu_custom_call.1']
    #allocation10 [shape = 'u8[8192]{0}', space=vmem, size = 0x2000, scoped, tag = 'output window, operand 0']
    %19 = vsyncpa [#allocation6], 0
    %s20 = scalar_lea.sflag [#allocation6], 1
    %21 = vsyncpa %s20, 0
    %22 = vsyncpa [#allocation9], 0
    %s23 = scalar_lea.sflag [#allocation9], 1
    %24 = vsyncpa %s23, 0
    %25 = vsyncpa [#allocation7], 0
    %s26 = scalar_lea.sflag [#allocation7], 1
    %27 = vsyncpa %s26, 0
    loop: start=0, step=1, limit=4
    $region2: #{tpu_custom_call.1} parent=1 // loop_pre_header
      _
    $region3: #{tpu_custom_call.1} parent=1 // loop_header
      %s29 = sphi 0, %s33
      %p30 = scmp.ge.s32.totalorder %s29, 4
      %s36 = sphi 0, %s55
      %s37 = sphi 0, %s51
      %s38 = sphi 0, %s47
      %s39 = sphi 0, %s36
      %s40 = sphi 0, %s37
      %s41 = sphi 0, %s38
      %s42 = sphi 0, %s39
      %s43 = sphi 0, %s40
      %s44 = sphi 0, %s41
      %s78 = sphi 0, %s80
      %s81 = sphi 0, %s78
      %s82 = sphi 0, %s81
      %s98 = sphi 0, %s82
      %s128 = sphi 0, %s130
      %s131 = sphi 0, %s128
      %s132 = sphi 0, %s131
      %s148 = sphi 0, %s132
      %s156 = sphi 0, %s158
      %s159 = sphi 0, %s156
      %s160 = sphi 0, %s159
      %s176 = sphi 0, %s160
    $region4: #{tpu_custom_call.1} parent=1 // loop_header_branch
      %32 = sbr.rel (%p30) target = $region8
    $region5: #{tpu_custom_call.1} parent=1 // loop_body
      %s34 = ssub.s32 %s29, 1
      %s35 = ssub.s32 %s29, 2
      %s45 = sadd.s32 1, %s38
      %p46 = scmp.ge.s32.totalorder %s45, 1
      %s47 = scalar_select %p46, 0, %s45
      %s48 = sadd.s32 1, %s37
      %s49 = scalar_select %p46, %s48, %s37
      %p50 = scmp.ge.s32.totalorder %s49, 2
      %s51 = scalar_select %p50, 0, %s49
      %s52 = sadd.s32 1, %s36
      %s53 = scalar_select %p50, %s52, %s36
      %p54 = scmp.ge.s32.totalorder %s53, 1
      %s55 = scalar_select %p54, 0, %s53
      %s56 = sshra.s32 %s38, 7
      %s57 = sand.u32 %s38, 127
      %s58 = sadd.s32 %s56, %s37
      %s59 = smul.u32 %s36, 2
      %s60 = sadd.s32 %s58, %s59
      %s61 = smul.u32 %s60, 128
      %s62 = sshra.s32 %s38, 7
      %s63 = sand.u32 %s38, 127
      %s64 = sadd.s32 %s61, %s63
      %s65 = sld [smem:[#allocation4 + %s64]]
      %s66 = sshra.s32 %s47, 7
      %s67 = sand.u32 %s47, 127
      %s68 = sadd.s32 %s66, %s51
      %s69 = smul.u32 %s55, 2
      %s70 = sadd.s32 %s68, %s69
      %s71 = smul.u32 %s70, 128
      %s72 = sshra.s32 %s47, 7
      %s73 = sand.u32 %s47, 127
      %s74 = sadd.s32 %s71, %s73
      %s75 = sld [smem:[#allocation4 + %s74]]
      %s76 = ssub.s32 %s65, %s75
      %p77 = scmp.eq.s32.totalorder %s76, 0
      %s79 = sadd.s32 %s78, 1
      %s80 = scalar_select %p77, %s78, %s79
      %p83 = pneg %p77
      %p84 = scmp.eq.s32.totalorder %s29, 1
      %p85 = por %p83, %p84
      %p86 = scmp.ne.s32.totalorder %s78, %s81
      %p87 = scmp.eq.s32.totalorder %s29, 0
      %p88 = por %p86, %p87
      %p89 = scmp.ne.s32.totalorder %s78, %s81
      %p90 = scmp.eq.s32.totalorder %s34, 1
      %p91 = por %p89, %p90
      %p92 = scmp.ne.s32.totalorder %s81, %s82
      %p93 = scmp.eq.s32.totalorder %s34, 0
      %p94 = por %p92, %p93
      %p95 = scmp.ne.s32.totalorder %s81, %s82
      %p96 = scmp.eq.s32.totalorder %s35, 1
      %p97 = por %p95, %p96
      %p99 = scmp.ne.s32.totalorder %s82, %s98
      %p100 = scmp.eq.s32.totalorder %s35, 0
      %p101 = por %p99, %p100
      %s102 = sshra.s32 %s38, 7
      %s103 = sand.u32 %s38, 127
      %s104 = sadd.s32 %s102, %s37
      %s105 = smul.u32 %s36, 2
      %s106 = sadd.s32 %s104, %s105
      %s107 = smul.u32 %s106, 128
      %s108 = sshra.s32 %s38, 7
      %s109 = sand.u32 %s38, 127
      %s110 = sadd.s32 %s107, %s109
      %s111 = sld [smem:[#allocation4 + %s110]]
      %s112 = sshra.s32 %s47, 7
      %s113 = sand.u32 %s47, 127
      %s114 = sadd.s32 %s112, %s51
      %s115 = smul.u32 %s55, 2
      %s116 = sadd.s32 %s114, %s115
      %s117 = smul.u32 %s116, 128
      %s118 = sshra.s32 %s47, 7
      %s119 = sand.u32 %s47, 127
      %s120 = sadd.s32 %s117, %s119
      %s121 = sld [smem:[#allocation4 + %s120]]
      %s122 = ssub.s32 %s36, %s55
      %s123 = ssub.s32 %s111, %s121
      %s124 = sor.u32 %s122, %s123
      %s125 = ssub.s32 %s37, %s51
      %s126 = sor.u32 %s124, %s125
      %p127 = scmp.eq.s32.totalorder %s126, 0
      %s129 = sadd.s32 %s128, 1
      %s130 = scalar_select %p127, %s128, %s129
      %p133 = pneg %p127
      %p134 = scmp.eq.s32.totalorder %s29, 1
      %p135 = por %p133, %p134
      %p136 = scmp.ne.s32.totalorder %s128, %s131
      %p137 = scmp.eq.s32.totalorder %s29, 0
      %p138 = por %p136, %p137
      %p139 = scmp.ne.s32.totalorder %s128, %s131
      %p140 = scmp.eq.s32.totalorder %s34, 1
      %p141 = por %p139, %p140
      %p142 = scmp.ne.s32.totalorder %s131, %s132
      %p143 = scmp.eq.s32.totalorder %s34, 0
      %p144 = por %p142, %p143
      %p145 = scmp.ne.s32.totalorder %s131, %s132
      %p146 = scmp.eq.s32.totalorder %s35, 1
      %p147 = por %p145, %p146
      %p149 = scmp.ne.s32.totalorder %s132, %s148
      %p150 = scmp.eq.s32.totalorder %s35, 0
      %p151 = por %p149, %p150
      %s152 = ssub.s32 %s36, %s55
      %s153 = ssub.s32 %s37, %s51
      %s154 = sor.u32 %s152, %s153
      %p155 = scmp.eq.s32.totalorder %s154, 0
      %s157 = sadd.s32 %s156, 1
      %s158 = scalar_select %p155, %s156, %s157
      %p161 = pneg %p155
      %p162 = scmp.eq.s32.totalorder %s29, 1
      %p163 = por %p161, %p162
      %p164 = scmp.ne.s32.totalorder %s156, %s159
      %p165 = scmp.eq.s32.totalorder %s29, 0
      %p166 = por %p164, %p165
      %p167 = scmp.ne.s32.totalorder %s156, %s159
      %p168 = scmp.eq.s32.totalorder %s34, 1
      %p169 = por %p167, %p168
      %p170 = scmp.ne.s32.totalorder %s159, %s160
      %p171 = scmp.eq.s32.totalorder %s34, 0
      %p172 = por %p170, %p171
      %p173 = scmp.ne.s32.totalorder %s159, %s160
      %p174 = scmp.eq.s32.totalorder %s35, 1
      %p175 = por %p173, %p174
      %p177 = scmp.ne.s32.totalorder %s160, %s176
      %p178 = scmp.eq.s32.totalorder %s35, 0
      %p179 = por %p177, %p178
      %p180 = scmp.le.s32.totalorder 1, %s29
      %p181 = scmp.lt.s32.totalorder %s29, 3
      %p182 = pnand %p180, %p181
      %p183 = pneg %p182
      // Predicated region
      $region9: #{tpu_custom_call.1} parent=5 // pred_check
        _
      $region10: #{tpu_custom_call.1} parent=5 // pred_check_branch
        %185 = sbr.rel (%p182) target = $region12
      $region11: #{tpu_custom_call.1} parent=5 // pred_region
        %s186 = ssub.s32 %s29, 1
      $region12: #{tpu_custom_call.1} parent=5 // pred_fallthru
        _
      %p187 = scmp.lt.s32.totalorder %s29, 2
      // Predicated region
      $region13: #{tpu_custom_call.1} parent=5 // pred_check
        %p188 = pneg %p187
      $region14: #{tpu_custom_call.1} parent=5 // pred_check_branch
        %190 = sbr.rel (%p188) target = $region16
      $region15: #{tpu_custom_call.1} parent=5 // pred_region
        // Predicated region
        $region17: #{tpu_custom_call.1} parent=15 // pred_check
          %p191 = pneg %p88
        $region18: #{tpu_custom_call.1} parent=15 // pred_check_branch
          %193 = sbr.rel (%p191) target = $region20
        $region19: #{tpu_custom_call.1} parent=15 // pred_region
          %s194 = sand.u32 %s78, 1
          %s195 = scalar_lea.sflag [#allocation6], %s194
          %s196 = sand.u32 %s78, 1
          %s197 = smul.addr %s196, 32
          %s198 = scalar_lea.vmem [#allocation5], %s197
          %s199 = sshra.s32 %s38, 7
          %s200 = sand.u32 %s38, 127
          %s201 = sadd.s32 %s199, %s37
          %s202 = smul.u32 %s36, 2
          %s203 = sadd.s32 %s201, %s202
          %s204 = smul.u32 %s203, 128
          %s205 = sshra.s32 %s38, 7
          %s206 = sand.u32 %s38, 127
          %s207 = sadd.s32 %s204, %s206
          %s208 = sld [smem:[#allocation4 + %s207]]
          %s210 = ssub.s32 512, 512
          %211 = vsyncadd %s195, %s210
          %s212 = smul.addr %s208, 4
          %s213 = smul.addr %s212, 128
          %s214 = scalar_lea.hbm %s2, %s213
          %s216 = sshll.u32 %s198, 4
          %s217 = int_to_ptr.vmem [resolvable:$true] %s216
          %219 = dma.hbm_to_vmem [thread:$0]  %s214, 512, %s217, %s195
        $region20: #{tpu_custom_call.1} parent=15 // pred_fallthru
          _
        // Predicated region
        $region21: #{tpu_custom_call.1} parent=15 // pred_check
          %p220 = pneg %p138
        $region22: #{tpu_custom_call.1} parent=15 // pred_check_branch
          %222 = sbr.rel (%p220) target = $region24
        $region23: #{tpu_custom_call.1} parent=15 // pred_region
          %s223 = sand.u32 %s128, 1
          %s224 = scalar_lea.sflag [#allocation9], %s223
          %s225 = sand.u32 %s128, 1
          %s226 = smul.addr %s225, 512
          %s227 = scalar_lea.vmem [#allocation8], %s226
          %s228 = sshra.s32 %s38, 7
          %s229 = sand.u32 %s38, 127
          %s230 = sadd.s32 %s228, %s37
          %s231 = smul.u32 %s36, 2
          %s232 = sadd.s32 %s230, %s231
          %s233 = smul.u32 %s232, 128
          %s234 = sshra.s32 %s38, 7
          %s235 = sand.u32 %s38, 127
          %s236 = sadd.s32 %s233, %s235
          %s237 = sld [smem:[#allocation4 + %s236]]
          %s238 = smul.u32 64, %s237
          %s240 = ssub.s32 8192, 8192
          %241 = vsyncadd %s224, %s240
          %s242 = smul.addr %s238, 2
          %s243 = sadd.s32 %s37, %s242
          %s244 = smul.addr %s36, 128
          %s245 = sadd.s32 %s243, %s244
          %s246 = smul.addr %s245, 128
          %s247 = scalar_lea.hbm %s3, %s246
          %s248 = sshll.u32 %s227, 4
          %s249 = int_to_ptr.vmem [resolvable:$true] %s248
          %254 = dma.hbm_to_vmem [thread:$0]  %s247, 8192, %s249, %s224, 256, 128, 8
        $region24: #{tpu_custom_call.1} parent=15 // pred_fallthru
          _
      $region16: #{tpu_custom_call.1} parent=5 // pred_fallthru
        _
      %p255 = scmp.le.s32.totalorder 1, %s29
      %p256 = scmp.lt.s32.totalorder %s29, 3
      %p257 = pnand %p255, %p256
      %p258 = pneg %p257
      // Predicated region
      $region25: #{tpu_custom_call.1} parent=5 // pred_check
        _
      $region26: #{tpu_custom_call.1} parent=5 // pred_check_branch
        %260 = sbr.rel (%p257) target = $region28
      $region27: #{tpu_custom_call.1} parent=5 // pred_region
        %s261 = ssub.s32 %s29, 1
        %s262 = sand.u32 %s81, 1
        %s263 = scalar_lea.sflag [#allocation6], %s262
        %s264 = sand.u32 %s81, 1
        %s265 = smul.addr %s264, 32
        %s266 = scalar_lea.vmem [#allocation5], %s265
        // Predicated region
        $region29: #{tpu_custom_call.1} parent=27 // pred_check
          %p267 = pneg %p94
        $region30: #{tpu_custom_call.1} parent=27 // pred_check_branch
          %269 = sbr.rel (%p267) target = $region32
        $region31: #{tpu_custom_call.1} parent=27 // pred_region
          %270 = dma.done %s263, 512
        $region32: #{tpu_custom_call.1} parent=27 // pred_fallthru
          _
        %s271 = sand.u32 %s131, 1
        %s272 = scalar_lea.sflag [#allocation9], %s271
        %s273 = sand.u32 %s131, 1
        %s274 = smul.addr %s273, 512
        %s275 = scalar_lea.vmem [#allocation8], %s274
        // Predicated region
        $region33: #{tpu_custom_call.1} parent=27 // pred_check
          %p276 = pneg %p144
        $region34: #{tpu_custom_call.1} parent=27 // pred_check_branch
          %278 = sbr.rel (%p276) target = $region36
        $region35: #{tpu_custom_call.1} parent=27 // pred_region
          %279 = dma.done %s272, 8192
        $region36: #{tpu_custom_call.1} parent=27 // pred_fallthru
          _
        %s280 = sand.u32 %s81, 1
        %s281 = scalar_lea.sflag [#allocation6], %s280
        %s282 = sand.u32 %s81, 1
        %s283 = smul.addr %s282, 32
        %s284 = scalar_lea.vmem [#allocation5], %s283
        %p285 = pneg %p94
        %p286 = pneg %p91
        %s287 = sand.u32 %s131, 1
        %s288 = scalar_lea.sflag [#allocation9], %s287
        %s289 = sand.u32 %s131, 1
        %s290 = smul.addr %s289, 512
        %s291 = scalar_lea.vmem [#allocation8], %s290
        %p292 = pneg %p144
        %p293 = pneg %p141
        %p294 = pneg %p172
        %p295 = pneg %p169
        %s296 = sand.u32 %s159, 1
        %s297 = scalar_lea.sflag [#allocation7], %s296
        %s298 = sand.u32 %s159, 1
        %s299 = smul.addr %s298, 8
        %s300 = scalar_lea.vmem [#allocation10], %s299
        %s301 = sshra.s32 %s41, 7
        %s302 = sand.u32 %s41, 127
        %s303 = sadd.s32 %s301, %s40
        %s304 = smul.u32 %s39, 2
        %s305 = sadd.s32 %s303, %s304
        %s306 = smul.u32 %s305, 128
        %s307 = sshra.s32 %s41, 7
        %s308 = sand.u32 %s41, 127
        %s309 = sadd.s32 %s306, %s308
        %s310 = sld [smem:[#allocation4 + %s309]]
        %s311 = sshra.s32 %s41, 7
        %s312 = sand.u32 %s41, 127
        %s313 = sadd.s32 %s311, %s40
        %s314 = smul.u32 %s39, 2
        %s315 = sadd.s32 %s313, %s314
        %s316 = smul.u32 %s315, 128
        %s317 = sshra.s32 %s41, 7
        %s318 = sand.u32 %s41, 127
        %s319 = sadd.s32 %s316, %s318
        %s320 = sld [smem:[#allocation4 + %s319]]
        %s321 = smul.u32 64, %s320
        %p322 = scmp.eq.s32.totalorder %s41, 0
        // Predicated region
        $region37: #{tpu_custom_call.1} parent=27 // pred_check
          %p323 = pneg %p322
        $region38: #{tpu_custom_call.1} parent=27 // pred_check_branch
          %325 = sbr.rel (%p323) target = $region40
        $region39: #{tpu_custom_call.1} parent=27 // pred_region
          %326 = vst [vmem:[%s300] sm:$0xff] 0.0
        $region40: #{tpu_custom_call.1} parent=27 // pred_fallthru
          _
        %s327 = sshra.s32 %s40, 7
        %s328 = sand.u32 %s40, 127
        %s329 = sadd.s32 %s327, %s39
        %s330 = smul.u32 %s329, 128
        %s331 = sshra.s32 %s40, 7
        %s332 = sand.u32 %s40, 127
        %s333 = sadd.s32 %s330, %s332
        %s334 = sld [smem:[#allocation3 + %s333]]
        %p335 = scmp.lt.s32.totalorder %s41, %s334
        // Predicated region
        $region41: #{tpu_custom_call.1} parent=27 // pred_check
          %p336 = pneg %p335
        $region42: #{tpu_custom_call.1} parent=27 // pred_check_branch
          %338 = sbr.rel (%p336) target = $region44
        $region43: #{tpu_custom_call.1} parent=27 // pred_region
          %v339 = vld [vmem:[%s266] sm:$0xff]
          %v340 = vld [vmem:[%s266 + $0x8] sm:$0xff]
          %v341 = vld [vmem:[%s266 + $0x10] sm:$0xff]
          %v342 = vld [vmem:[%s266 + $0x18] sm:$0xff]
          %v343 = vld [vmem:[%s300] sm:$0xff]
          %v344 = vld [vmem:[%s275] sm:$0xff]
          %v345 = vld [vmem:[%s275 + $0x8] sm:$0xff]
          %v346 = vld [vmem:[%s275 + $0x10] sm:$0xff]
          %v347 = vld [vmem:[%s275 + $0x18] sm:$0xff]
          %v348 = vld [vmem:[%s275 + $0x20] sm:$0xff]
          %v349 = vld [vmem:[%s275 + $0x28] sm:$0xff]
          %v350 = vld [vmem:[%s275 + $0x30] sm:$0xff]
          %v351 = vld [vmem:[%s275 + $0x38] sm:$0xff]
          %v352 = vld [vmem:[%s275 + $0x40] sm:$0xff]
          %v353 = vld [vmem:[%s275 + $0x48] sm:$0xff]
          %v354 = vld [vmem:[%s275 + $0x50] sm:$0xff]
          %v355 = vld [vmem:[%s275 + $0x58] sm:$0xff]
          %v356 = vld [vmem:[%s275 + $0x60] sm:$0xff]
          %v357 = vld [vmem:[%s275 + $0x68] sm:$0xff]
          %v358 = vld [vmem:[%s275 + $0x70] sm:$0xff]
          %v359 = vld [vmem:[%s275 + $0x78] sm:$0xff]
          %v360 = vld [vmem:[%s275 + $0x80] sm:$0xff]
          %v361 = vld [vmem:[%s275 + $0x88] sm:$0xff]
          %v362 = vld [vmem:[%s275 + $0x90] sm:$0xff]
          %v363 = vld [vmem:[%s275 + $0x98] sm:$0xff]
          %v364 = vld [vmem:[%s275 + $0xa0] sm:$0xff]
          %v365 = vld [vmem:[%s275 + $0xa8] sm:$0xff]
          %v366 = vld [vmem:[%s275 + $0xb0] sm:$0xff]
          %v367 = vld [vmem:[%s275 + $0xb8] sm:$0xff]
          %v368 = vld [vmem:[%s275 + $0xc0] sm:$0xff]
          %v369 = vld [vmem:[%s275 + $0xc8] sm:$0xff]
          %v370 = vld [vmem:[%s275 + $0xd0] sm:$0xff]
          %v371 = vld [vmem:[%s275 + $0xd8] sm:$0xff]
          %v372 = vld [vmem:[%s275 + $0xe0] sm:$0xff]
          %v373 = vld [vmem:[%s275 + $0xe8] sm:$0xff]
          %v374 = vld [vmem:[%s275 + $0xf0] sm:$0xff]
          %v375 = vld [vmem:[%s275 + $0xf8] sm:$0xff]
          %v376 = vld [vmem:[%s275 + $0x100] sm:$0xff]
          %v377 = vld [vmem:[%s275 + $0x108] sm:$0xff]
          %v378 = vld [vmem:[%s275 + $0x110] sm:$0xff]
          %v379 = vld [vmem:[%s275 + $0x118] sm:$0xff]
          %v380 = vld [vmem:[%s275 + $0x120] sm:$0xff]
          %v381 = vld [vmem:[%s275 + $0x128] sm:$0xff]
          %v382 = vld [vmem:[%s275 + $0x130] sm:$0xff]
          %v383 = vld [vmem:[%s275 + $0x138] sm:$0xff]
          %v384 = vld [vmem:[%s275 + $0x140] sm:$0xff]
          %v385 = vld [vmem:[%s275 + $0x148] sm:$0xff]
          %v386 = vld [vmem:[%s275 + $0x150] sm:$0xff]
          %v387 = vld [vmem:[%s275 + $0x158] sm:$0xff]
          %v388 = vld [vmem:[%s275 + $0x160] sm:$0xff]
          %v389 = vld [vmem:[%s275 + $0x168] sm:$0xff]
          %v390 = vld [vmem:[%s275 + $0x170] sm:$0xff]
          %v391 = vld [vmem:[%s275 + $0x178] sm:$0xff]
          %v392 = vld [vmem:[%s275 + $0x180] sm:$0xff]
          %v393 = vld [vmem:[%s275 + $0x188] sm:$0xff]
          %v394 = vld [vmem:[%s275 + $0x190] sm:$0xff]
          %v395 = vld [vmem:[%s275 + $0x198] sm:$0xff]
          %v396 = vld [vmem:[%s275 + $0x1a0] sm:$0xff]
          %v397 = vld [vmem:[%s275 + $0x1a8] sm:$0xff]
          %v398 = vld [vmem:[%s275 + $0x1b0] sm:$0xff]
          %v399 = vld [vmem:[%s275 + $0x1b8] sm:$0xff]
          %v400 = vld [vmem:[%s275 + $0x1c0] sm:$0xff]
          %v401 = vld [vmem:[%s275 + $0x1c8] sm:$0xff]
          %v402 = vld [vmem:[%s275 + $0x1d0] sm:$0xff]
          %v403 = vld [vmem:[%s275 + $0x1d8] sm:$0xff]
          %v404 = vld [vmem:[%s275 + $0x1e0] sm:$0xff]
          %v405 = vld [vmem:[%s275 + $0x1e8] sm:$0xff]
          %v406 = vld [vmem:[%s275 + $0x1f0] sm:$0xff]
          %v407 = vld [vmem:[%s275 + $0x1f8] sm:$0xff]
          %408 = vmatprep.subr.mxu0 0.0
          %409 = vmatpush1.msra.mxu0 %v344
          %410 = vmatprep.subr.mxu0 0.0
          %411 = vmatpush1.msra.mxu0 %v345
          %412 = vmatprep.subr.mxu0 0.0
          %413 = vmatpush1.msra.mxu0 %v346
          %414 = vmatprep.subr.mxu0 0.0
          %415 = vmatpush1.msra.mxu0 %v347
          %416 = vmatprep.subr.mxu0 0.0
          %417 = vmatpush1.msra.mxu0 %v348
          %418 = vmatprep.subr.mxu0 0.0
          %419 = vmatpush1.msra.mxu0 %v349
          %420 = vmatprep.subr.mxu0 0.0
          %421 = vmatpush1.msra.mxu0 %v350
          %422 = vmatprep.subr.mxu0 0.0
          %423 = vmatpush1.msra.mxu0 %v351
          %424 = vmatprep.subr.mxu0 0.0
          %425 = vmatpush1.msra.mxu0 %v352
          %426 = vmatprep.subr.mxu0 0.0
          %427 = vmatpush1.msra.mxu0 %v353
          %428 = vmatprep.subr.mxu0 0.0
          %429 = vmatpush1.msra.mxu0 %v354
          %430 = vmatprep.subr.mxu0 0.0
          %431 = vmatpush1.msra.mxu0 %v355
          %432 = vmatprep.subr.mxu0 0.0
          %433 = vmatpush1.msra.mxu0 %v356
          %434 = vmatprep.subr.mxu0 0.0
          %435 = vmatpush1.msra.mxu0 %v357
          %436 = vmatprep.subr.mxu0 0.0
          %437 = vmatpush1.msra.mxu0 %v358
          %438 = vmatprep.subr.mxu0 0.0
          %439 = vmatpush1.msra.mxu0 %v359
          %440 = vmatprep.subr.mxu0 0.0
          %441 = vmatpush1.msra.mxu0 %v360
          %442 = vmatprep.subr.mxu0 0.0
          %443 = vmatpush1.msra.mxu0 %v361
          %444 = vmatprep.subr.mxu0 0.0
          %445 = vmatpush1.msra.mxu0 %v362
          %446 = vmatprep.subr.mxu0 0.0
          %447 = vmatpush1.msra.mxu0 %v363
          %448 = vmatprep.subr.mxu0 0.0
          %449 = vmatpush1.msra.mxu0 %v364
          %450 = vmatprep.subr.mxu0 0.0
          %451 = vmatpush1.msra.mxu0 %v365
          %452 = vmatprep.subr.mxu0 0.0
          %453 = vmatpush1.msra.mxu0 %v366
          %454 = vmatprep.subr.mxu0 0.0
          %455 = vmatpush1.msra.mxu0 %v367
          %456 = vmatprep.subr.mxu0 0.0
          %457 = vmatpush1.msra.mxu0 %v368
          %458 = vmatprep.subr.mxu0 0.0
          %459 = vmatpush1.msra.mxu0 %v369
          %460 = vmatprep.subr.mxu0 0.0
          %461 = vmatpush1.msra.mxu0 %v370
          %462 = vmatprep.subr.mxu0 0.0
          %463 = vmatpush1.msra.mxu0 %v371
          %464 = vmatprep.subr.mxu0 0.0
          %465 = vmatpush1.msra.mxu0 %v372
          %466 = vmatprep.subr.mxu0 0.0
          %467 = vmatpush1.msra.mxu0 %v373
          %468 = vmatprep.subr.mxu0 0.0
          %469 = vmatpush1.msra.mxu0 %v374
          %470 = vmatprep.subr.mxu0 0.0
          %471 = vmatpush1.msra.mxu0 %v375
          %472 = vmatprep.mubr.f32.mxu0 %v340
          %473 = vmatmul.mubr.f32.gmra.mrb[0].mxu0 %v339
          %v474 = vpop.f32.mrb[0].mxu0
          %v475 = vadd.f32 0.0, %v474
          %v476 = vpop.f32.mrb[0].mxu0
          %477 = vdwg.mxu0
          %478 = vmatprep.subr.mxu0 0.0
          %479 = vmatpush1.msra.mxu0 %v376
          %480 = vmatprep.subr.mxu0 0.0
          %481 = vmatpush1.msra.mxu0 %v377
          %482 = vmatprep.subr.mxu0 0.0
          %483 = vmatpush1.msra.mxu0 %v378
          %484 = vmatprep.subr.mxu0 0.0
          %485 = vmatpush1.msra.mxu0 %v379
          %486 = vmatprep.subr.mxu0 0.0
          %487 = vmatpush1.msra.mxu0 %v380
          %488 = vmatprep.subr.mxu0 0.0
          %489 = vmatpush1.msra.mxu0 %v381
          %490 = vmatprep.subr.mxu0 0.0
          %491 = vmatpush1.msra.mxu0 %v382
          %492 = vmatprep.subr.mxu0 0.0
          %493 = vmatpush1.msra.mxu0 %v383
          %494 = vmatprep.subr.mxu0 0.0
          %495 = vmatpush1.msra.mxu0 %v384
          %496 = vmatprep.subr.mxu0 0.0
          %497 = vmatpush1.msra.mxu0 %v385
          %498 = vmatprep.subr.mxu0 0.0
          %499 = vmatpush1.msra.mxu0 %v386
          %500 = vmatprep.subr.mxu0 0.0
          %501 = vmatpush1.msra.mxu0 %v387
          %502 = vmatprep.subr.mxu0 0.0
          %503 = vmatpush1.msra.mxu0 %v388
          %504 = vmatprep.subr.mxu0 0.0
          %505 = vmatpush1.msra.mxu0 %v389
          %506 = vmatprep.subr.mxu0 0.0
          %507 = vmatpush1.msra.mxu0 %v390
          %508 = vmatprep.subr.mxu0 0.0
          %509 = vmatpush1.msra.mxu0 %v391
          %510 = vmatprep.subr.mxu0 0.0
          %511 = vmatpush1.msra.mxu0 %v392
          %512 = vmatprep.subr.mxu0 0.0
          %513 = vmatpush1.msra.mxu0 %v393
          %514 = vmatprep.subr.mxu0 0.0
          %515 = vmatpush1.msra.mxu0 %v394
          %516 = vmatprep.subr.mxu0 0.0
          %517 = vmatpush1.msra.mxu0 %v395
          %518 = vmatprep.subr.mxu0 0.0
          %519 = vmatpush1.msra.mxu0 %v396
          %520 = vmatprep.subr.mxu0 0.0
          %521 = vmatpush1.msra.mxu0 %v397
          %522 = vmatprep.subr.mxu0 0.0
          %523 = vmatpush1.msra.mxu0 %v398
          %524 = vmatprep.subr.mxu0 0.0
          %525 = vmatpush1.msra.mxu0 %v399
          %526 = vmatprep.subr.mxu0 0.0
          %527 = vmatpush1.msra.mxu0 %v400
          %528 = vmatprep.subr.mxu0 0.0
          %529 = vmatpush1.msra.mxu0 %v401
          %530 = vmatprep.subr.mxu0 0.0
          %531 = vmatpush1.msra.mxu0 %v402
          %532 = vmatprep.subr.mxu0 0.0
          %533 = vmatpush1.msra.mxu0 %v403
          %534 = vmatprep.subr.mxu0 0.0
          %535 = vmatpush1.msra.mxu0 %v404
          %536 = vmatprep.subr.mxu0 0.0
          %537 = vmatpush1.msra.mxu0 %v405
          %538 = vmatprep.subr.mxu0 0.0
          %539 = vmatpush1.msra.mxu0 %v406
          %540 = vmatprep.subr.mxu0 0.0
          %541 = vmatpush1.msra.mxu0 %v407
          %542 = vmatprep.mubr.f32.mxu0 %v342
          %543 = vmatmul.mubr.f32.gmra.mrb[0].mxu0 %v341
          %v544 = vpop.f32.mrb[0].mxu0
          %v545 = vadd.f32 %v475, %v544
          %v546 = vpop.f32.mrb[0].mxu0
          %547 = vdwg.mxu0
          %v548 = vadd.f32 %v343, %v545
          %549 = vst [vmem:[%s300] sm:$0xff] %v548
        $region44: #{tpu_custom_call.1} parent=27 // pred_fallthru
          _
        %s550 = sand.u32 %s159, 1
        %s551 = scalar_lea.sflag [#allocation7], %s550
        %s552 = sand.u32 %s159, 1
        %s553 = smul.addr %s552, 8
        %s554 = scalar_lea.vmem [#allocation10], %s553
        // Predicated region
        $region45: #{tpu_custom_call.1} parent=27 // pred_check
          %p555 = pneg %p169
        $region46: #{tpu_custom_call.1} parent=27 // pred_check_branch
          %557 = sbr.rel (%p555) target = $region48
        $region47: #{tpu_custom_call.1} parent=27 // pred_region
          %s559 = ssub.s32 128, 128
          %560 = vsyncadd %s551, %s559
          %s561 = smul.addr %s39, 2
          %s562 = sadd.s32 %s40, %s561
          %s563 = smul.addr %s562, 128
          %s564 = scalar_lea.hbm %s4, %s563
          %s566 = sshll.u32 %s554, 4
          %s567 = int_to_ptr.vmem [resolvable:$true] %s566
          %569 = dma.vmem_to_hbm [thread:$0]  %s567, 128, %s564, %s551
        $region48: #{tpu_custom_call.1} parent=27 // pred_fallthru
          _
      $region28: #{tpu_custom_call.1} parent=5 // pred_fallthru
        _
      %p570 = scmp.le.s32.totalorder 2, %s29
      // Predicated region
      $region49: #{tpu_custom_call.1} parent=5 // pred_check
        %p571 = pneg %p570
      $region50: #{tpu_custom_call.1} parent=5 // pred_check_branch
        %573 = sbr.rel (%p571) target = $region52
      $region51: #{tpu_custom_call.1} parent=5 // pred_region
        %s574 = ssub.s32 %s29, 2
        // Predicated region
        $region53: #{tpu_custom_call.1} parent=51 // pred_check
          %p575 = pneg %p175
        $region54: #{tpu_custom_call.1} parent=51 // pred_check_branch
          %577 = sbr.rel (%p575) target = $region56
        $region55: #{tpu_custom_call.1} parent=51 // pred_region
          %s578 = sand.u32 %s160, 1
          %s579 = scalar_lea.sflag [#allocation7], %s578
          %s580 = sand.u32 %s160, 1
          %s581 = smul.addr %s580, 8
          %s582 = scalar_lea.vmem [#allocation10], %s581
          %583 = dma.done %s579, 128
        $region56: #{tpu_custom_call.1} parent=51 // pred_fallthru
          _
      $region52: #{tpu_custom_call.1} parent=5 // pred_fallthru
        _
    $region6: #{tpu_custom_call.1} parent=1 // loop_footer
      %s33 = sadd.s32 1, %s29
    $region7: #{tpu_custom_call.1} parent=1 // loop_footer_branch
      %28 = sbr.rel target = $region3
    $region8: #{tpu_custom_call.1} parent=1 // loop_exit
      _
    %584 = vsyncpa [#allocation6], 1
    %s585 = scalar_lea.sflag [#allocation6], 1
    %586 = vsyncpa %s585, 1
    %587 = vsyncpa [#allocation9], 1
    %s588 = scalar_lea.sflag [#allocation9], 1
    %589 = vsyncpa %s588, 1
    %590 = vsyncpa [#allocation7], 1
    %s591 = scalar_lea.sflag [#allocation7], 1
    %592 = vsyncpa %s591, 1

</llo_original>
